<compile_context>
chip_gen: v5e
topology: v5e:2x2
jax: 0.10.0
libtpu: 0.0.40
codegen_flags: <defaults>
</compile_context>

<pallas_src>
import jax
import jax.numpy as jnp
from jax.experimental import pallas as pl
from jax.experimental.pallas import tpu as pltpu

HIDDEN = 64
OUT = 10
HP = 128                      # hidden dim zero-padded to a full 128-lane vreg

VMEM_LIMIT = 32 * 1024 * 1024   # scoped-VMEM limit we request (safe on v5e/v6e/v7x)
TILE_BUDGET = 24 * 1024 * 1024  # what we tile against (headroom under the limit)
SMALL_BUDGET = 8 * 1024 * 1024  # grid-less path only if everything fits in this


def _mlp_kernel(x_ref, w1_ref, b1_ref, w2_ref, b2_ref, o_ref):
    # fc1: [TB, F] @ [F, 128] + [1, 128]
    h = jnp.dot(x_ref[...], w1_ref[...], preferred_element_type=jnp.float32)
    h = h + b1_ref[...]
    # sigmoid(x) == 0.5 * (tanh(x/2) + 1): single EUP op + VALU fma, exact.
    h = 0.5 * (jnp.tanh(0.5 * h) + 1.0)
    # fc2: [TB, 128] @ [128, 10] + [1, 10]
    # Padded hidden lanes of h are sigmoid(0) = 0.5, but the matching
    # zero-padded rows of w2 make their contribution exactly 0.
    out = jnp.dot(h, w2_ref[...], preferred_element_type=jnp.float32)
    o_ref[...] = (out + b2_ref[...]).astype(o_ref.dtype)


def prepare_params(w1, b1, w2, b2):
    """Pad parameters ONCE (not per forward call).

    w1: [F, 64] -> [F, 128], b1: [64] -> [1, 128]
    w2: [64, 10] -> [128, 10] (zero rows for padded lanes), b2: [10] -> [1, 10]
    """
    F, H = w1.shape
    O = w2.shape[1]
    dt = w1.dtype
    w1p = jnp.zeros((F, HP), dt).at[:, :H].set(w1)
    b1p = jnp.zeros((1, HP), dt).at[0, :H].set(b1)
    w2p = jnp.zeros((HP, O), dt).at[:H, :].set(w2)
    b2p = b2.reshape(1, O).astype(dt)
    return w1p, b1p, w2p, b2p


def _choose_tile_b(B, F):
    """Largest batch tile that fits the VMEM budget, with >= ~8 grid steps."""
    # Resident operands are double-buffered by the default pipeline.
    # TODO(synk): pipeline_mode=pl.Buffered(1) on the weight specs would
    # reclaim the second weight buffer if supported by the installed version.
    resident = 2 * 4 * (F * HP + HP + HP * OUT + OUT)
    per_row = 2 * 4 * (F + OUT)          # double-buffered x tile + out tile
    avail = max(TILE_BUDGET - resident, per_row * 64)
    tb = min(1024, avail // per_row)
    tb = max(64, (tb // 8) * 8)          # sublane-aligned
    # Keep enough grid steps for pipeline overlap and v7x's 2 TensorCores.
    while tb > 128 and pl.cdiv(B, tb) < 8:
        tb = max(128, ((tb // 2) // 8) * 8)
    return int(tb)


def _small_path_ok(B, F):
    x_bytes = B * F * 4
    out_bytes = B * OUT * 4
    w_bytes = 4 * (F * HP + HP + HP * OUT + OUT)
    return (B <= 1024) and (x_bytes + out_bytes + w_bytes) <= SMALL_BUDGET


def _mlp_small(x, w1p, b1p, w2p, b2p):
    # Grid-less call: no pipeline prologue/epilogue, no double buffering.
    B, _ = x.shape
    vmem = pl.BlockSpec(memory_space=pltpu.MemorySpace.VMEM)
    return pl.pallas_call(
        _mlp_kernel,
        out_shape=jax.ShapeDtypeStruct((B, OUT), x.dtype),
        in_specs=[vmem] * 5,
        out_specs=vmem,
        compiler_params=pltpu.CompilerParams(vmem_limit_bytes=VMEM_LIMIT),
    )(x, w1p, b1p, w2p, b2p)


def _mlp_tiled(x, w1p, b1p, w2p, b2p, *, tb):
    # Batch-tiled path: weights stay VMEM-resident across the grid (constant
    # index_map); only x and out stream. Ragged last block handled by Pallas
    # (no explicit batch pad). Batch axis is "parallel" for megacore sharding.
    B, F = x.shape
    grid = (pl.cdiv(B, tb),)
    return pl.pallas_call(
        _mlp_kernel,
        out_shape=jax.ShapeDtypeStruct((B, OUT), x.dtype),
        grid=grid,
        in_specs=[
            pl.BlockSpec((tb, F), lambda i: (i, 0)),
            pl.BlockSpec((F, HP), lambda i: (0, 0)),
            pl.BlockSpec((1, HP), lambda i: (0, 0)),
            pl.BlockSpec((HP, OUT), lambda i: (0, 0)),
            pl.BlockSpec((1, OUT), lambda i: (0, 0)),
        ],
        out_specs=pl.BlockSpec((tb, OUT), lambda i: (i, 0)),
        compiler_params=pltpu.CompilerParams(
            dimension_semantics=("parallel",),
            vmem_limit_bytes=VMEM_LIMIT),
    )(x, w1p, b1p, w2p, b2p)


@jax.jit
def mlp_forward(x, w1p, b1p, w2p, b2p):
    """Forward pass of NN: fc1 -> sigmoid -> fc2.

    x: [B, F]; padded params from prepare_params(); returns [B, 10].
    """
    B, F = x.shape
    if _small_path_ok(B, F):
        return _mlp_small(x, w1p, b1p, w2p, b2p)
    tb = _choose_tile_b(B, F)
    return _mlp_tiled(x, w1p, b1p, w2p, b2p, tb=tb)


def init_params(key, in_features, hidden=HIDDEN, out_features=OUT):
    # Deterministic init matching PyTorch nn.Linear default:
    # U(-1/sqrt(fan_in), 1/sqrt(fan_in)) for both weight and bias.
    k1, k2, k3, k4 = jax.random.split(key, 4)
    bound1 = 1.0 / jnp.sqrt(in_features)
    bound2 = 1.0 / jnp.sqrt(hidden)
    w1 = jax.random.uniform(k1, (in_features, hidden), jnp.float32,
                            minval=-bound1, maxval=bound1)
    b1 = jax.random.uniform(k2, (hidden,), jnp.float32,
                            minval=-bound1, maxval=bound1)
    w2 = jax.random.uniform(k3, (hidden, out_features), jnp.float32,
                            minval=-bound2, maxval=bound2)
    b2 = jax.random.uniform(k4, (out_features,), jnp.float32,
                            minval=-bound2, maxval=bound2)
    return w1, b1, w2, b2


def _reference(x, w1, b1, w2, b2):
    h = 1.0 / (1.0 + jnp.exp(-(x @ w1 + b1)))
    return h @ w2 + b2


if __name__ == "__main__":
    key = jax.random.PRNGKey(0)
    k_x, k_p, k_xl = jax.random.split(key, 3)

    B, F = 8, 32          # X_train.shape[1] is not given; choose F=32
    w1, b1, w2, b2 = init_params(k_p, F, HIDDEN, OUT)
    params = prepare_params(w1, b1, w2, b2)   # padded once, reused every call

    # Small-batch (grid-less) path.
    x = jax.random.normal(k_x, (B, F), jnp.float32)
    out = jax.block_until_ready(mlp_forward(x, *params))
    ref = _reference(x, w1, b1, w2, b2)
    assert out.shape == (B, OUT)
    assert jnp.allclose(out, ref, atol=1e-5, rtol=1e-5), "small-path mismatch"

    # Large, ragged batch -> tiled path (resident weights, parallel batch grid,
    # no batch padding; last block is masked).
    BL = 4000
    xl = jax.random.normal(k_xl, (BL, F), jnp.float32)
    out_l = jax.block_until_ready(mlp_forward(xl, *params))
    ref_l = _reference(xl, w1, b1, w2, b2)
    assert out_l.shape == (BL, OUT)
    assert jnp.allclose(out_l, ref_l, atol=1e-5, rtol=1e-5), "tiled-path mismatch"

    print("KERNEL_OK")
</pallas_src>

<mosaic_0001>
module attributes {stable_mosaic.version = 11 : i64} {
  func.func @_mlp_kernel(%arg0: memref<8x32xf32, #tpu.memory_space<vmem>>, %arg1: memref<32x128xf32, #tpu.memory_space<vmem>>, %arg2: memref<1x128xf32, #tpu.memory_space<vmem>>, %arg3: memref<128x10xf32, #tpu.memory_space<vmem>>, %arg4: memref<1x10xf32, #tpu.memory_space<vmem>>, %arg5: memref<8x10xf32, #tpu.memory_space<vmem>>) attributes {dimension_semantics = [], scalar_prefetch = 0 : i64, scratch_operands = 0 : i64, tpu.core_type = #tpu.core_type<tc>} {
    %c0 = arith.constant 0 : index
    %c0_0 = arith.constant 0 : index
    %0 = vector.load %arg0[%c0, %c0_0] : memref<8x32xf32, #tpu.memory_space<vmem>>, vector<8x32xf32>
    %c0_1 = arith.constant 0 : index
    %c0_2 = arith.constant 0 : index
    %1 = vector.load %arg1[%c0_1, %c0_2] : memref<32x128xf32, #tpu.memory_space<vmem>>, vector<32x128xf32>
    %cst = arith.constant dense<0.000000e+00> : vector<8x128xf32>
    %2 = tpu.matmul %0, %1, %cst {dimension_numbers = #tpu.dot_dimension_numbers<[1], [0], [0], [1], [0, 0, 1, 1], [], []>} : vector<8x32xf32>, vector<32x128xf32>, vector<8x128xf32> -> vector<8x128xf32>
    %c0_3 = arith.constant 0 : index
    %c0_4 = arith.constant 0 : index
    %3 = vector.load %arg2[%c0_3, %c0_4] : memref<1x128xf32, #tpu.memory_space<vmem>>, vector<1x128xf32>
    %4 = vector.broadcast %3 : vector<1x128xf32> to vector<8x128xf32>
    %5 = arith.addf %2, %4 : vector<8x128xf32>
    %cst_5 = arith.constant 5.000000e-01 : f32
    %6 = vector.broadcast %cst_5 : f32 to vector<8x128xf32>
    %7 = arith.mulf %6, %5 : vector<8x128xf32>
    %8 = math.tanh %7 : vector<8x128xf32>
    %cst_6 = arith.constant 1.000000e+00 : f32
    %9 = vector.broadcast %cst_6 : f32 to vector<8x128xf32>
    %10 = arith.addf %8, %9 : vector<8x128xf32>
    %cst_7 = arith.constant 5.000000e-01 : f32
    %11 = vector.broadcast %cst_7 : f32 to vector<8x128xf32>
    %12 = arith.mulf %11, %10 : vector<8x128xf32>
    %c0_8 = arith.constant 0 : index
    %c0_9 = arith.constant 0 : index
    %13 = vector.load %arg3[%c0_8, %c0_9] : memref<128x10xf32, #tpu.memory_space<vmem>>, vector<128x10xf32>
    %cst_10 = arith.constant dense<0.000000e+00> : vector<8x10xf32>
    %14 = tpu.matmul %12, %13, %cst_10 {dimension_numbers = #tpu.dot_dimension_numbers<[1], [0], [0], [1], [0, 0, 1, 1], [], []>} : vector<8x128xf32>, vector<128x10xf32>, vector<8x10xf32> -> vector<8x10xf32>
    %c0_11 = arith.constant 0 : index
    %c0_12 = arith.constant 0 : index
    %15 = vector.load %arg4[%c0_11, %c0_12] : memref<1x10xf32, #tpu.memory_space<vmem>>, vector<1x10xf32>
    %16 = vector.broadcast %15 : vector<1x10xf32> to vector<8x10xf32>
    %17 = arith.addf %14, %16 : vector<8x10xf32>
    %c0_13 = arith.constant 0 : index
    %c0_14 = arith.constant 0 : index
    %18 = vector.load %arg5[%c0_13, %c0_14] : memref<8x10xf32, #tpu.memory_space<vmem>>, vector<8x10xf32>
    tpu.vector_store %arg5[%c0_13, %c0_14], %17 {strides = array<i32>} : memref<8x10xf32, #tpu.memory_space<vmem>>, vector<8x10xf32>,
    return
  }
}

</mosaic_0001>

<llo_original>
// kernel: mlp_forward.1
$region0: #{mlp_forward.1}
  #allocation0 [shape = 'u32[]', space=smem, size = 0x4, offset = 0x4, fixed_abs, tag = 'smem constant byte address 0x4 - core index']
  #allocation1 [shape = 'u32[72,128]{1,0:T(1,128)}', space=vmem, size = 0x9000, scoped, tag = 'internal scratch']
  %s0 = inlined_call_operand.vmem [shape: f32[8,32], index: 0, kind: input, shape index: {}]
  %s1 = inlined_call_operand.vmem [shape: f32[32,128], index: 1, kind: input, shape index: {}]
  %s2 = inlined_call_operand.vmem [shape: f32[1,128], index: 2, kind: input, shape index: {}]
  %s3 = inlined_call_operand.vmem [shape: f32[128,10], index: 3, kind: input, shape index: {}]
  %s4 = inlined_call_operand.vmem [shape: f32[1,10], index: 4, kind: input, shape index: {}]
  %s5 = inlined_call_operand.hbm [shape: f32[8,10], index: 5, kind: output, shape index: {}]
  %s6 = sld [smem:[#allocation0]]
  $region30: #{mlp_forward.1} parent=0
    _
  %s8 = ssub.s32 1, %s6
  %s9 = scalar_select 0, %s8, %s6
  $region1: #{mlp_forward.1} parent=0
    #allocation2 [shape = 'u8[4096]{0}', space=vmem, size = 0x1000, scoped, tag = 'output window, operand 0, single buffered']
    #allocation3 [shape = 's32[1]{0}', space=sflag, size = 0x4, scoped, tag = 'scoped memory for mlp_forward.1']
    %10 = vsyncpa [#allocation3], 0
    // Predicated region
    $region2: #{mlp_forward.1} parent=1 // pred_check
      _
    $region3: #{mlp_forward.1} parent=1 // pred_check_branch
      %12 = sbr.rel (0) target = $region5
    $region4: #{mlp_forward.1} parent=1 // pred_region
      _
    $region5: #{mlp_forward.1} parent=1 // pred_fallthru
      _
    // Predicated region
    $region6: #{mlp_forward.1} parent=1 // pred_check
      _
    $region7: #{mlp_forward.1} parent=1 // pred_check_branch
      %14 = sbr.rel (0) target = $region9
    $region8: #{mlp_forward.1} parent=1 // pred_region
      _
    $region9: #{mlp_forward.1} parent=1 // pred_fallthru
      _
    // Predicated region
    $region10: #{mlp_forward.1} parent=1 // pred_check
      _
    $region11: #{mlp_forward.1} parent=1 // pred_check_branch
      %16 = sbr.rel (0) target = $region13
    $region12: #{mlp_forward.1} parent=1 // pred_region
      _
    $region13: #{mlp_forward.1} parent=1 // pred_fallthru
      _
    // Predicated region
    $region14: #{mlp_forward.1} parent=1 // pred_check
      _
    $region15: #{mlp_forward.1} parent=1 // pred_check_branch
      %18 = sbr.rel (0) target = $region17
    $region16: #{mlp_forward.1} parent=1 // pred_region
      _
    $region17: #{mlp_forward.1} parent=1 // pred_fallthru
      _
    // Predicated region
    $region18: #{mlp_forward.1} parent=1 // pred_check
      _
    $region19: #{mlp_forward.1} parent=1 // pred_check_branch
      %20 = sbr.rel (0) target = $region21
    $region20: #{mlp_forward.1} parent=1 // pred_region
      _
    $region21: #{mlp_forward.1} parent=1 // pred_fallthru
      _
    %v21 = vld [vmem:[%s0] sm:$0xff]
    %v22 = vld [vmem:[%s1] sm:$0xff]
    %v23 = vld [vmem:[%s1 + $0x8] sm:$0xff]
    %v24 = vld [vmem:[%s1 + $0x10] sm:$0xff]
    %v25 = vld [vmem:[%s1 + $0x18] sm:$0xff]
    %v26 = vld [vmem:[%s2] sm:$0x1]
    %v28 = vperm.slane %v26, 0
    %vm30 = vcmask 261120
    %v32 = vsel %vm30, %v21, 0
    %34 = vmatpush.msra.mxu0 0.0
    %35 = vmatpush.msra.mxu0 0.0
    %36 = vmatpush.msra.mxu0 0.0
    %37 = vmatpush.msra.mxu0 0.0
    %38 = vmatpush.msra.mxu0 0.0
    %39 = vmatpush.msra.mxu0 0.0
    %40 = vmatpush.msra.mxu0 0.0
    %41 = vmatpush.msra.mxu0 0.0
    %42 = vmatpush.msra.mxu0 0.0
    %43 = vmatpush.msra.mxu0 0.0
    %44 = vmatpush.msra.mxu0 0.0
    %45 = vmatpush.msra.mxu0 0.0
    %46 = vmatpush.msra.mxu0 %v25
    %47 = vmatpush.msra.mxu0 %v24
    %48 = vmatpush.msra.mxu0 %v23
    %49 = vmatpush.msra.mxu0 %v22
    %50 = vmatmul.f32.gmra.mxu0 %v32
    %v51 = vpop.f32.mrf.mxu0
    %v52 = vadd.f32 %v28, %v51
    %53 = vdwg.mxu0
    %v54 = vmul.f32 %v52, 0.5
    %v55 = vtanh.pop %v54
    %v56 = vadd.f32 %v55, 1.0
    %v57 = vmul.f32 %v56, 0.5
    %v58 = vld [vmem:[%s3] sm:$0xff]
    %v59 = vld [vmem:[%s3 + $0x8] sm:$0xff]
    %v60 = vld [vmem:[%s3 + $0x10] sm:$0xff]
    %v61 = vld [vmem:[%s3 + $0x18] sm:$0xff]
    %v62 = vld [vmem:[%s3 + $0x20] sm:$0xff]
    %v63 = vld [vmem:[%s3 + $0x28] sm:$0xff]
    %v64 = vld [vmem:[%s3 + $0x30] sm:$0xff]
    %v65 = vld [vmem:[%s3 + $0x38] sm:$0xff]
    %v66 = vld [vmem:[%s3 + $0x40] sm:$0xff]
    %v67 = vld [vmem:[%s3 + $0x48] sm:$0xff]
    %v68 = vld [vmem:[%s3 + $0x50] sm:$0xff]
    %v69 = vld [vmem:[%s3 + $0x58] sm:$0xff]
    %v70 = vld [vmem:[%s3 + $0x60] sm:$0xff]
    %v71 = vld [vmem:[%s3 + $0x68] sm:$0xff]
    %v72 = vld [vmem:[%s3 + $0x70] sm:$0xff]
    %v73 = vld [vmem:[%s3 + $0x78] sm:$0xff]
    %v74 = vld [vmem:[%s4] sm:$0x1]
    %v76 = vperm.slane %v74, 0
    %78 = vmatpush.msra.mxu0 %v73
    %79 = vmatpush.msra.mxu0 %v72
    %80 = vmatpush.msra.mxu0 %v71
    %81 = vmatpush.msra.mxu0 %v70
    %82 = vmatpush.msra.mxu0 %v69
    %83 = vmatpush.msra.mxu0 %v68
    %84 = vmatpush.msra.mxu0 %v67
    %85 = vmatpush.msra.mxu0 %v66
    %86 = vmatpush.msra.mxu0 %v65
    %87 = vmatpush.msra.mxu0 %v64
    %88 = vmatpush.msra.mxu0 %v63
    %89 = vmatpush.msra.mxu0 %v62
    %90 = vmatpush.msra.mxu0 %v61
    %91 = vmatpush.msra.mxu0 %v60
    %92 = vmatpush.msra.mxu0 %v59
    %93 = vmatpush.msra.mxu0 %v58
    %94 = vmatmul.f32.gmra.mxu0 %v57
    %v95 = vpop.f32.mrf.mxu0
    %v96 = vadd.f32 %v76, %v95
    %97 = vdwg.mxu0
    %vm98 = vcmask 80896
    %99 = vst.msk [vmem:[#allocation2] sm:$0xff] %vm98, %v96
    // Predicated region
    $region22: #{mlp_forward.1} parent=1 // pred_check
      _
    $region23: #{mlp_forward.1} parent=1 // pred_check_branch
      %101 = sbr.rel (0) target = $region25
    $region24: #{mlp_forward.1} parent=1 // pred_region
      %103 = vsyncadd [#allocation3], 0
      %s105 = sshll.u32 [#allocation2], 4
      %s106 = int_to_ptr.vmem [resolvable:$true] %s105
      %s107 = sshll.u32 %s5, 4
      %s108 = int_to_ptr.hbm [resolvable:$true] %s107
      %110 = dma.vmem_to_hbm [thread:$0]  %s106, 128, %s108, [#allocation3]
    $region25: #{mlp_forward.1} parent=1 // pred_fallthru
      _
    // Predicated region
    $region26: #{mlp_forward.1} parent=1 // pred_check
      _
    $region27: #{mlp_forward.1} parent=1 // pred_check_branch
      %112 = sbr.rel (0) target = $region29
    $region28: #{mlp_forward.1} parent=1 // pred_region
      %114 = dma.done [#allocation3], 128
    $region29: #{mlp_forward.1} parent=1 // pred_fallthru
      _
    %115 = vsyncpa [#allocation3], 1

</llo_original>
